<compile_context>
chip_gen: v7x
topology: tpu7x:2x2x1
jax: 0.10.0
libtpu: 0.0.40
codegen_flags: <defaults>
</compile_context>

<pallas_src>
import jax
import jax.numpy as jnp
from jax.experimental import pallas as pl
from jax.experimental.pallas import tpu as pltpu

HIDDEN = 256


def _round_up(a, m):
    return (a + m - 1) // m * m


def clone_actor_kernel(x_ref, w1_ref, b1_ref, w2_ref, b2_ref, w3_ref, sbb_ref, out_ref):
    # fc1 + ReLU: cast x f32->bf16 in-kernel; contraction runs at K=obs_dim (MXU pads).
    h1 = jnp.dot(x_ref[...].astype(jnp.bfloat16), w1_ref[...],
                 preferred_element_type=jnp.float32)
    h1 = jnp.maximum(h1 + b1_ref[...], 0.0)
    # fc2 + ReLU
    h2 = jnp.dot(h1.astype(jnp.bfloat16), w2_ref[...],
                 preferred_element_type=jnp.float32)
    h2 = jnp.maximum(h2 + b2_ref[...], 0.0)
    # fc_mu + tanh (EUP) + action rescale (VPU) — hidden under MXU/DMA slack.
    mu = jnp.dot(h2.astype(jnp.bfloat16), w3_ref[...],
                 preferred_element_type=jnp.float32)
    mu = jnp.tanh(mu + sbb_ref[0:1, :])                  # b3
    out_ref[...] = mu * sbb_ref[1:2, :] + sbb_ref[2:3, :]  # action_scale, action_bias


def prepare_params(params):
    """One-time conversion: bf16 weights, f32 (1,H) biases, packed (3,act) epilogue."""
    w1, b1, w2, b2, w3, b3, action_scale, action_bias = params
    hidden = w1.shape[1]
    w1_b = w1.astype(jnp.bfloat16)
    w2_b = w2.astype(jnp.bfloat16)
    w3_b = w3.astype(jnp.bfloat16)
    b1_2d = b1.reshape(1, hidden).astype(jnp.float32)
    b2_2d = b2.reshape(1, hidden).astype(jnp.float32)
    sbb = jnp.stack([b3.astype(jnp.float32),
                     action_scale.astype(jnp.float32),
                     action_bias.astype(jnp.float32)], axis=0)   # (3, act_dim)
    return (w1_b, b1_2d, w2_b, b2_2d, w3_b, sbb)


def _choose_batch_tiling(B, block_m):
    """Pick (tm, padded_B). Small batches: one tile sized to B (rounded to 8).
    Large batches: an even (>=2) number of roughly equal tiles so the 'parallel'
    batch axis shards cleanly across v7x's 2 TensorCores with minimal padding."""
    if B < 1024:
        tm = _round_up(max(B, 8), 8)
        return tm, tm
    n_tiles = max(2, -(-B // block_m))
    if n_tiles % 2:
        n_tiles += 1
    tm = _round_up(-(-B // n_tiles), 8)
    return tm, tm * n_tiles


def clone_actor_forward(x, prepared, *, block_m=2048):
    """x: (B, obs_dim) float32 -> (B, act_dim) float32."""
    w1_b, b1_2d, w2_b, b2_2d, w3_b, sbb = prepared
    B, obs_dim = x.shape
    hidden = w1_b.shape[1]
    act_dim = w3_b.shape[1]

    tm, B_p = _choose_batch_tiling(B, block_m)
    if B_p != B:
        x = jnp.pad(x, ((0, B_p - B), (0, 0)))
    grid = (B_p // tm,)

    # Block index never changes across grid steps -> DMA'd once, VMEM-resident.
    resident = lambda shape: pl.BlockSpec(shape, lambda i: (0, 0))

    cost = pl.CostEstimate(
        flops=2 * B_p * (obs_dim * hidden + hidden * hidden + hidden * act_dim),
        transcendentals=B_p * act_dim,
        bytes_accessed=(B_p * obs_dim * 4 + B_p * act_dim * 4
                        + (obs_dim + hidden + act_dim) * hidden * 2
                        + (2 * hidden + 3 * act_dim) * 4),
    )

    out_p = pl.pallas_call(
        clone_actor_kernel,
        out_shape=jax.ShapeDtypeStruct((B_p, act_dim), jnp.float32),
        grid=grid,
        in_specs=[
            pl.BlockSpec((tm, obs_dim), lambda i: (i, 0)),  # x (f32, tiled over batch)
            resident((obs_dim, hidden)),                    # w1 (bf16)
            resident((1, hidden)),                          # b1 (f32)
            resident((hidden, hidden)),                     # w2 (bf16)
            resident((1, hidden)),                          # b2 (f32)
            resident((hidden, act_dim)),                    # w3 (bf16)
            resident((3, act_dim)),                         # [b3; scale; bias] (f32)
        ],
        out_specs=pl.BlockSpec((tm, act_dim), lambda i: (i, 0)),
        compiler_params=pltpu.CompilerParams(
            dimension_semantics=("parallel",),  # shard batch tiles across v7x's 2 TCs
        ),
        cost_estimate=cost,
    )(x, w1_b, b1_2d, w2_b, b2_2d, w3_b, sbb)

    return out_p[:B] if B_p != B else out_p


def init_params(key, obs_dim, act_dim, hidden=HIDDEN):
    """Deterministic synthetic parameters (shapes match CloneActor.__init__).
    Weights stored pre-transposed as (in, out) so y = x @ W + b matches torch's x @ W.T."""
    k1, k2, k3, k4, k5, k6 = jax.random.split(key, 6)
    w1 = jax.random.normal(k1, (obs_dim, hidden), jnp.float32) * 0.05
    b1 = jax.random.normal(k2, (hidden,), jnp.float32) * 0.05
    w2 = jax.random.normal(k3, (hidden, hidden), jnp.float32) * 0.05
    b2 = jax.random.normal(k4, (hidden,), jnp.float32) * 0.05
    w3 = jax.random.normal(k5, (hidden, act_dim), jnp.float32) * 0.05
    b3 = jax.random.normal(k6, (act_dim,), jnp.float32) * 0.05
    # Synthetic action space: low=-2, high=2  => scale=2, bias=0
    action_scale = jnp.full((act_dim,), 2.0, jnp.float32)
    action_bias = jnp.zeros((act_dim,), jnp.float32)
    return (w1, b1, w2, b2, w3, b3, action_scale, action_bias)


def reference_forward_f32(x, params):
    w1, b1, w2, b2, w3, b3, action_scale, action_bias = params
    h1 = jnp.maximum(x @ w1 + b1, 0.0)
    h2 = jnp.maximum(h1 @ w2 + b2, 0.0)
    mu = jnp.tanh(h2 @ w3 + b3)
    return mu * action_scale + action_bias


def reference_forward_bf16(x, params):
    """Mirrors the kernel's bf16-matmul / f32-accumulate path."""
    w1, b1, w2, b2, w3, b3, action_scale, action_bias = params
    h1 = jnp.dot(x.astype(jnp.bfloat16), w1.astype(jnp.bfloat16),
                 preferred_element_type=jnp.float32)
    h1 = jnp.maximum(h1 + b1, 0.0)
    h2 = jnp.dot(h1.astype(jnp.bfloat16), w2.astype(jnp.bfloat16),
                 preferred_element_type=jnp.float32)
    h2 = jnp.maximum(h2 + b2, 0.0)
    mu = jnp.dot(h2.astype(jnp.bfloat16), w3.astype(jnp.bfloat16),
                 preferred_element_type=jnp.float32)
    mu = jnp.tanh(mu + b3)
    return mu * action_scale + action_bias


if __name__ == "__main__":
    key = jax.random.PRNGKey(0)
    kp, kx1, kx2, kx3 = jax.random.split(key, 4)

    obs_dim, act_dim = 32, 8
    raw_params = init_params(kp, obs_dim, act_dim)
    prepared = prepare_params(raw_params)   # one-time weight conversion / packing

    # Small batch (single grid step).
    x1 = jax.random.normal(kx1, (8, obs_dim), jnp.float32)
    o1 = jax.block_until_ready(clone_actor_forward(x1, prepared))
    assert o1.shape == (8, act_dim)
    assert jnp.allclose(o1, reference_forward_bf16(x1, raw_params), atol=2e-3, rtol=2e-3), \
        "mismatch vs bf16 reference (B=8)"
    assert jnp.allclose(o1, reference_forward_f32(x1, raw_params), atol=5e-2, rtol=5e-2), \
        "mismatch vs f32 reference (B=8)"

    # Medium batch (single tile sized to B, no batch padding since 600 % 8 == 0).
    x2 = jax.random.normal(kx2, (600, obs_dim), jnp.float32)
    o2 = jax.block_until_ready(clone_actor_forward(x2, prepared))
    assert o2.shape == (600, act_dim)
    assert jnp.allclose(o2, reference_forward_bf16(x2, raw_params), atol=2e-3, rtol=2e-3), \
        "mismatch vs bf16 reference (B=600)"

    # Large batch: 2 balanced tiles (tm=1304, B_p=2608) -> multi-step grid + batch padding.
    x3 = jax.random.normal(kx3, (2600, obs_dim), jnp.float32)
    o3 = jax.block_until_ready(clone_actor_forward(x3, prepared))
    assert o3.shape == (2600, act_dim)
    assert jnp.allclose(o3, reference_forward_bf16(x3, raw_params), atol=2e-3, rtol=2e-3), \
        "mismatch vs bf16 reference (B=2600)"

    print("KERNEL_OK")
</pallas_src>

<mosaic_0001>
module attributes {stable_mosaic.version = 11 : i64} {
  func.func @clone_actor_kernel(%arg0: i32, %arg1: memref<8x32xf32, #tpu.memory_space<vmem>>, %arg2: memref<32x256xbf16, #tpu.memory_space<vmem>>, %arg3: memref<1x256xf32, #tpu.memory_space<vmem>>, %arg4: memref<256x256xbf16, #tpu.memory_space<vmem>>, %arg5: memref<1x256xf32, #tpu.memory_space<vmem>>, %arg6: memref<256x8xbf16, #tpu.memory_space<vmem>>, %arg7: memref<3x8xf32, #tpu.memory_space<vmem>>, %arg8: memref<8x8xf32, #tpu.memory_space<vmem>>) attributes {dimension_semantics = [#tpu.dimension_semantics<parallel>], iteration_bounds = array<i64: 1>, scalar_prefetch = 0 : i64, scratch_operands = 0 : i64, tpu.core_type = #tpu.core_type<tc>, window_params = [{transform_indices = @transform_0, window_bounds = array<i64: 8, 32>}, {pipeline_mode = #tpu.pipeline_mode<synchronous>, transform_indices = @transform_1, window_bounds = array<i64: 32, 256>}, {pipeline_mode = #tpu.pipeline_mode<synchronous>, transform_indices = @transform_2, window_bounds = array<i64: 1, 256>}, {pipeline_mode = #tpu.pipeline_mode<synchronous>, transform_indices = @transform_3, window_bounds = array<i64: 256, 256>}, {pipeline_mode = #tpu.pipeline_mode<synchronous>, transform_indices = @transform_4, window_bounds = array<i64: 1, 256>}, {pipeline_mode = #tpu.pipeline_mode<synchronous>, transform_indices = @transform_5, window_bounds = array<i64: 256, 8>}, {pipeline_mode = #tpu.pipeline_mode<synchronous>, transform_indices = @transform_6, window_bounds = array<i64: 3, 8>}, {transform_indices = @transform_7, window_bounds = array<i64: 8, 8>}]} {
    %c0 = arith.constant 0 : index
    %c0_0 = arith.constant 0 : index
    %0 = vector.load %arg1[%c0, %c0_0] : memref<8x32xf32, #tpu.memory_space<vmem>>, vector<8x32xf32>
    %1 = arith.truncf %0 : vector<8x32xf32> to vector<8x32xbf16>
    %c0_1 = arith.constant 0 : index
    %c0_2 = arith.constant 0 : index
    %2 = vector.load %arg2[%c0_1, %c0_2] : memref<32x256xbf16, #tpu.memory_space<vmem>>, vector<32x256xbf16>
    %cst = arith.constant dense<0.000000e+00> : vector<8x256xf32>
    %3 = tpu.matmul %1, %2, %cst {dimension_numbers = #tpu.dot_dimension_numbers<[1], [0], [0], [1], [0, 0, 1, 1], [], []>} : vector<8x32xbf16>, vector<32x256xbf16>, vector<8x256xf32> -> vector<8x256xf32>
    %c0_3 = arith.constant 0 : index
    %c0_4 = arith.constant 0 : index
    %4 = vector.load %arg3[%c0_3, %c0_4] : memref<1x256xf32, #tpu.memory_space<vmem>>, vector<1x256xf32>
    %5 = vector.broadcast %4 : vector<1x256xf32> to vector<8x256xf32>
    %6 = arith.addf %3, %5 : vector<8x256xf32>
    %cst_5 = arith.constant 0.000000e+00 : f32
    %7 = vector.broadcast %cst_5 : f32 to vector<8x256xf32>
    %8 = arith.maximumf %6, %7 : vector<8x256xf32>
    %9 = arith.truncf %8 : vector<8x256xf32> to vector<8x256xbf16>
    %c0_6 = arith.constant 0 : index
    %c0_7 = arith.constant 0 : index
    %10 = vector.load %arg4[%c0_6, %c0_7] : memref<256x256xbf16, #tpu.memory_space<vmem>>, vector<256x256xbf16>
    %cst_8 = arith.constant dense<0.000000e+00> : vector<8x256xf32>
    %11 = tpu.matmul %9, %10, %cst_8 {dimension_numbers = #tpu.dot_dimension_numbers<[1], [0], [0], [1], [0, 0, 1, 1], [], []>} : vector<8x256xbf16>, vector<256x256xbf16>, vector<8x256xf32> -> vector<8x256xf32>
    %c0_9 = arith.constant 0 : index
    %c0_10 = arith.constant 0 : index
    %12 = vector.load %arg5[%c0_9, %c0_10] : memref<1x256xf32, #tpu.memory_space<vmem>>, vector<1x256xf32>
    %13 = vector.broadcast %12 : vector<1x256xf32> to vector<8x256xf32>
    %14 = arith.addf %11, %13 : vector<8x256xf32>
    %cst_11 = arith.constant 0.000000e+00 : f32
    %15 = vector.broadcast %cst_11 : f32 to vector<8x256xf32>
    %16 = arith.maximumf %14, %15 : vector<8x256xf32>
    %17 = arith.truncf %16 : vector<8x256xf32> to vector<8x256xbf16>
    %c0_12 = arith.constant 0 : index
    %c0_13 = arith.constant 0 : index
    %18 = vector.load %arg6[%c0_12, %c0_13] : memref<256x8xbf16, #tpu.memory_space<vmem>>, vector<256x8xbf16>
    %cst_14 = arith.constant dense<0.000000e+00> : vector<8x8xf32>
    %19 = tpu.matmul %17, %18, %cst_14 {dimension_numbers = #tpu.dot_dimension_numbers<[1], [0], [0], [1], [0, 0, 1, 1], [], []>} : vector<8x256xbf16>, vector<256x8xbf16>, vector<8x8xf32> -> vector<8x8xf32>
    %c0_15 = arith.constant 0 : index
    %c0_16 = arith.constant 0 : index
    %20 = vector.load %arg7[%c0_15, %c0_16] : memref<3x8xf32, #tpu.memory_space<vmem>>, vector<1x8xf32>
    %21 = vector.broadcast %20 : vector<1x8xf32> to vector<8x8xf32>
    %22 = arith.addf %19, %21 : vector<8x8xf32>
    %23 = math.tanh %22 : vector<8x8xf32>
    %c1 = arith.constant 1 : index
    %c0_17 = arith.constant 0 : index
    %24 = vector.load %arg7[%c1, %c0_17] : memref<3x8xf32, #tpu.memory_space<vmem>>, vector<1x8xf32>
    %25 = vector.broadcast %24 : vector<1x8xf32> to vector<8x8xf32>
    %26 = arith.mulf %23, %25 : vector<8x8xf32>
    %c2 = arith.constant 2 : index
    %c0_18 = arith.constant 0 : index
    %27 = vector.load %arg7[%c2, %c0_18] : memref<3x8xf32, #tpu.memory_space<vmem>>, vector<1x8xf32>
    %28 = vector.broadcast %27 : vector<1x8xf32> to vector<8x8xf32>
    %29 = arith.addf %26, %28 : vector<8x8xf32>
    %c0_19 = arith.constant 0 : index
    %c0_20 = arith.constant 0 : index
    %30 = vector.load %arg8[%c0_19, %c0_20] : memref<8x8xf32, #tpu.memory_space<vmem>>, vector<8x8xf32>
    tpu.vector_store %arg8[%c0_19, %c0_20], %29 {strides = array<i32>} : memref<8x8xf32, #tpu.memory_space<vmem>>, vector<8x8xf32>,
    return
  }
  func.func @transform_0(%arg0: i32) -> (i32, i32) {
    %c0_i32 = arith.constant 0 : i32
    %c0_i32_0 = arith.constant 0 : i32
    return %arg0, %c0_i32 : i32, i32
  }
  func.func @transform_1(%arg0: i32) -> (i32, i32) {
    %c0_i32 = arith.constant 0 : i32
    %c0_i32_0 = arith.constant 0 : i32
    %c0_i32_1 = arith.constant 0 : i32
    return %c0_i32, %c0_i32_0 : i32, i32
  }
  func.func @transform_2(%arg0: i32) -> (i32, i32) {
    %c0_i32 = arith.constant 0 : i32
    %c0_i32_0 = arith.constant 0 : i32
    %c0_i32_1 = arith.constant 0 : i32
    return %c0_i32, %c0_i32_0 : i32, i32
  }
  func.func @transform_3(%arg0: i32) -> (i32, i32) {
    %c0_i32 = arith.constant 0 : i32
    %c0_i32_0 = arith.constant 0 : i32
    %c0_i32_1 = arith.constant 0 : i32
    return %c0_i32, %c0_i32_0 : i32, i32
  }
  func.func @transform_4(%arg0: i32) -> (i32, i32) {
    %c0_i32 = arith.constant 0 : i32
    %c0_i32_0 = arith.constant 0 : i32
    %c0_i32_1 = arith.constant 0 : i32
    return %c0_i32, %c0_i32_0 : i32, i32
  }
  func.func @transform_5(%arg0: i32) -> (i32, i32) {
    %c0_i32 = arith.constant 0 : i32
    %c0_i32_0 = arith.constant 0 : i32
    %c0_i32_1 = arith.constant 0 : i32
    return %c0_i32, %c0_i32_0 : i32, i32
  }
  func.func @transform_6(%arg0: i32) -> (i32, i32) {
    %c0_i32 = arith.constant 0 : i32
    %c0_i32_0 = arith.constant 0 : i32
    %c0_i32_1 = arith.constant 0 : i32
    return %c0_i32, %c0_i32_0 : i32, i32
  }
  func.func @transform_7(%arg0: i32) -> (i32, i32) {
    %c0_i32 = arith.constant 0 : i32
    %c0_i32_0 = arith.constant 0 : i32
    return %arg0, %c0_i32 : i32, i32
  }
}

</mosaic_0001>

<llo_original>
// kernel: tpu_custom_call.1
$region0: #{tpu_custom_call.1}
  #allocation0 [shape = 'u32[]', space=smem, size = 0x4, offset = 0x4, fixed_abs, tag = 'smem constant byte address 0x4 - core index']
  #allocation1 [shape = 'u32[144,128]{1,0:T(1,128)}', space=vmem, size = 0x12000, scoped, tag = 'internal scratch']
  %s0 = inlined_call_operand.vmem [shape: f32[8,32], index: 0, kind: input, shape index: {}]
  %s1 = inlined_call_operand.vmem [shape: bf16[32,256], index: 1, kind: input, shape index: {}]
  %s2 = inlined_call_operand.vmem [shape: f32[1,256], index: 2, kind: input, shape index: {}]
  %s3 = inlined_call_operand.hbm [shape: bf16[256,256], index: 3, kind: input, shape index: {}]
  %s4 = inlined_call_operand.vmem [shape: f32[1,256], index: 4, kind: input, shape index: {}]
  %s5 = inlined_call_operand.vmem [shape: bf16[256,8], index: 5, kind: input, shape index: {}]
  %s6 = inlined_call_operand.vmem [shape: f32[3,8], index: 6, kind: input, shape index: {}]
  %s7 = inlined_call_operand.hbm [shape: f32[8,8], index: 7, kind: output, shape index: {}]
  %s8 = sld [smem:[#allocation0]]
  $region42: #{tpu_custom_call.1} parent=0
    _
  %s10 = ssub.s32 1, %s8
  %s11 = scalar_select 0, %s10, %s8
  $region1: #{tpu_custom_call.1} parent=0
    #allocation2 [shape = 'u8[131072]{0}', space=vmem, size = 0x20000, scoped, tag = 'input window, operand 3, single buffered']
    #allocation3 [shape = 's32[1]{0}', space=sflag, size = 0x4, scoped, tag = 'scoped memory for tpu_custom_call.1']
    #allocation4 [shape = 's32[1]{0}', space=sflag, size = 0x4, scoped, tag = 'scoped memory for tpu_custom_call.1']
    #allocation5 [shape = 'u8[4096]{0}', space=vmem, size = 0x1000, scoped, tag = 'output window, operand 0, single buffered']
    %12 = vsyncpa [#allocation3], 0
    %13 = vsyncpa [#allocation4], 0
    // Predicated region
    $region2: #{tpu_custom_call.1} parent=1 // pred_check
      _
    $region3: #{tpu_custom_call.1} parent=1 // pred_check_branch
      %15 = sbr.rel (0) target = $region5
    $region4: #{tpu_custom_call.1} parent=1 // pred_region
      _
    $region5: #{tpu_custom_call.1} parent=1 // pred_fallthru
      _
    // Predicated region
    $region6: #{tpu_custom_call.1} parent=1 // pred_check
      _
    $region7: #{tpu_custom_call.1} parent=1 // pred_check_branch
      %17 = sbr.rel (0) target = $region9
    $region8: #{tpu_custom_call.1} parent=1 // pred_region
      _
    $region9: #{tpu_custom_call.1} parent=1 // pred_fallthru
      _
    // Predicated region
    $region10: #{tpu_custom_call.1} parent=1 // pred_check
      _
    $region11: #{tpu_custom_call.1} parent=1 // pred_check_branch
      %19 = sbr.rel (0) target = $region13
    $region12: #{tpu_custom_call.1} parent=1 // pred_region
      _
    $region13: #{tpu_custom_call.1} parent=1 // pred_fallthru
      _
    // Predicated region
    $region14: #{tpu_custom_call.1} parent=1 // pred_check
      _
    $region15: #{tpu_custom_call.1} parent=1 // pred_check_branch
      %21 = sbr.rel (0) target = $region17
    $region16: #{tpu_custom_call.1} parent=1 // pred_region
      %s23 = ssub.s32 4096, 4096
      %24 = vsyncadd [#allocation3], %s23
      %s25 = sshll.u32 [#allocation2], 4
      %s26 = int_to_ptr.vmem [resolvable:$true] %s25
      %31 = dma.hbm_to_vmem [thread:$0]  %s3, 4096, %s26, [#allocation3], 128, 128, 8
    $region17: #{tpu_custom_call.1} parent=1 // pred_fallthru
      _
    // Predicated region
    $region18: #{tpu_custom_call.1} parent=1 // pred_check
      _
    $region19: #{tpu_custom_call.1} parent=1 // pred_check_branch
      %33 = sbr.rel (0) target = $region21
    $region20: #{tpu_custom_call.1} parent=1 // pred_region
      _
    $region21: #{tpu_custom_call.1} parent=1 // pred_fallthru
      _
    // Predicated region
    $region22: #{tpu_custom_call.1} parent=1 // pred_check
      _
    $region23: #{tpu_custom_call.1} parent=1 // pred_check_branch
      %35 = sbr.rel (0) target = $region25
    $region24: #{tpu_custom_call.1} parent=1 // pred_region
      _
    $region25: #{tpu_custom_call.1} parent=1 // pred_fallthru
      _
    // Predicated region
    $region26: #{tpu_custom_call.1} parent=1 // pred_check
      _
    $region27: #{tpu_custom_call.1} parent=1 // pred_check_branch
      %37 = sbr.rel (0) target = $region29
    $region28: #{tpu_custom_call.1} parent=1 // pred_region
      _
    $region29: #{tpu_custom_call.1} parent=1 // pred_fallthru
      _
    // Predicated region
    $region30: #{tpu_custom_call.1} parent=1 // pred_check
      _
    $region31: #{tpu_custom_call.1} parent=1 // pred_check_branch
      %39 = sbr.rel (0) target = $region33
    $region32: #{tpu_custom_call.1} parent=1 // pred_region
      %40 = dma.done [#allocation3], 4096
    $region33: #{tpu_custom_call.1} parent=1 // pred_fallthru
      _
    %v42 = vld [vmem:[%s0] sm:$0xff]
    %v43 = vpack.c.bf16 %v42, %v42
    %v44 = vld [vmem:[%s1] sm:$0xff]
    %v45 = vld [vmem:[%s1 + $0x8] sm:$0xff]
    %v46 = vld [vmem:[%s1 + $0x10] sm:$0xff]
    %v47 = vld [vmem:[%s1 + $0x18] sm:$0xff]
    %v48 = vld [vmem:[%s2] sm:$0x3]
    %v50 = vlaneseq
    %v51 = vshrl.u32 %v50, 7
    %v52 = vsub.s32 0, %v51
    %v53 = vrot.slane %v48, %v52
    %v54 = vlaneseq
    %v55 = vshrl.u32 %v54, 7
    %v56 = vsub.s32 1, %v55
    %v57 = vrot.slane %v48, %v56
    %v64 = vunpack.c.l.b16 %v44
    %v65 = vunpack.c.h.b16 %v44
    %v66 = vunpack.c.l.b16 %v45
    %v67 = vunpack.c.h.b16 %v45
    %v68 = vunpack.c.l.b16 %v46
    %v69 = vunpack.c.h.b16 %v46
    %v70 = vunpack.c.l.b16 %v47
    %v71 = vunpack.c.h.b16 %v47
    %v72 = vpack.c.b16 %v66, %v64
    %v73 = vpack.c.b16 %v67, %v65
    %v74 = vpack.c.b16 %v70, %v68
    %v75 = vpack.c.b16 %v71, %v69
    %vm80 = vcmask 261120
    %v82 = vsel %vm80, %v43, 0
    %84 = vmatprep.subr.bf16.mxu0 %v73
    %85 = vmatpush1.bf16.msra.mxu0 %v72
    %86 = vmatprep.subr.bf16.mxu0 %v75
    %87 = vmatpush1.bf16.msra.mxu0 %v74
    %88 = vmatprep.subr.bf16.mxu0 0
    %89 = vmatpush1.bf16.msra.mxu0 0
    %90 = vmatprep.subr.bf16.mxu0 0
    %91 = vmatpush1.bf16.msra.mxu0 0
    %92 = vmatprep.subr.bf16.mxu0 0
    %93 = vmatpush1.bf16.msra.mxu0 0
    %94 = vmatprep.subr.bf16.mxu0 0
    %95 = vmatpush1.bf16.msra.mxu0 0
    %96 = vmatprep.subr.bf16.mxu0 0
    %97 = vmatpush1.bf16.msra.mxu0 0
    %98 = vmatprep.subr.bf16.mxu0 0
    %99 = vmatpush1.bf16.msra.mxu0 0
    %100 = vmatprep.subr.bf16.mxu0 0
    %101 = vmatpush1.bf16.msra.mxu0 0
    %102 = vmatprep.subr.bf16.mxu0 0
    %103 = vmatpush1.bf16.msra.mxu0 0
    %104 = vmatprep.subr.bf16.mxu0 0
    %105 = vmatpush1.bf16.msra.mxu0 0
    %106 = vmatprep.subr.bf16.mxu0 0
    %107 = vmatpush1.bf16.msra.mxu0 0
    %108 = vmatprep.subr.bf16.mxu0 0
    %109 = vmatpush1.bf16.msra.mxu0 0
    %110 = vmatprep.subr.bf16.mxu0 0
    %111 = vmatpush1.bf16.msra.mxu0 0
    %112 = vmatprep.subr.bf16.mxu0 0
    %113 = vmatpush1.bf16.msra.mxu0 0
    %114 = vmatprep.subr.bf16.mxu0 0
    %115 = vmatpush1.bf16.msra.mxu0 0
    %116 = vmatprep.mubr.bf16.mxu0 0
    %117 = vmatmul.mubr.bf16.gmra.mrb[0].mxu0 %v82
    %v118 = vpop.f32.mrb[0].mxu0
    %v119 = vadd.f32 %v53, %v118
    %v120 = vpop.f32.mrb[0].mxu0
    %v121 = vadd.f32 %v57, %v120
    %v122 = vpop.f32.mrb[0].mxu0
    %v123 = vpop.f32.mrb[0].mxu0
    %124 = vdwg.mxu0
    %v125 = vmax.f32 %v119, 0.0
    %v126 = vmax.f32 %v121, 0.0
    %v127 = vpack.c.bf16 %v125, %v125
    %v128 = vpack.c.bf16 %v126, %v126
    %v129 = vld [vmem:[#allocation2] sm:$0xff]
    %v130 = vld [vmem:[#allocation2 + $0x8] sm:$0xff]
    %v131 = vld [vmem:[#allocation2 + $0x10] sm:$0xff]
    %v132 = vld [vmem:[#allocation2 + $0x18] sm:$0xff]
    %v133 = vld [vmem:[#allocation2 + $0x20] sm:$0xff]
    %v134 = vld [vmem:[#allocation2 + $0x28] sm:$0xff]
    %v135 = vld [vmem:[#allocation2 + $0x30] sm:$0xff]
    %v136 = vld [vmem:[#allocation2 + $0x38] sm:$0xff]
    %v137 = vld [vmem:[#allocation2 + $0x40] sm:$0xff]
    %v138 = vld [vmem:[#allocation2 + $0x48] sm:$0xff]
    %v139 = vld [vmem:[#allocation2 + $0x50] sm:$0xff]
    %v140 = vld [vmem:[#allocation2 + $0x58] sm:$0xff]
    %v141 = vld [vmem:[#allocation2 + $0x60] sm:$0xff]
    %v142 = vld [vmem:[#allocation2 + $0x68] sm:$0xff]
    %v143 = vld [vmem:[#allocation2 + $0x70] sm:$0xff]
    %v144 = vld [vmem:[#allocation2 + $0x78] sm:$0xff]
    %v145 = vld [vmem:[#allocation2 + $0x80] sm:$0xff]
    %v146 = vld [vmem:[#allocation2 + $0x88] sm:$0xff]
    %v147 = vld [vmem:[#allocation2 + $0x90] sm:$0xff]
    %v148 = vld [vmem:[#allocation2 + $0x98] sm:$0xff]
    %v149 = vld [vmem:[#allocation2 + $0xa0] sm:$0xff]
    %v150 = vld [vmem:[#allocation2 + $0xa8] sm:$0xff]
    %v151 = vld [vmem:[#allocation2 + $0xb0] sm:$0xff]
    %v152 = vld [vmem:[#allocation2 + $0xb8] sm:$0xff]
    %v153 = vld [vmem:[#allocation2 + $0xc0] sm:$0xff]
    %v154 = vld [vmem:[#allocation2 + $0xc8] sm:$0xff]
    %v155 = vld [vmem:[#allocation2 + $0xd0] sm:$0xff]
    %v156 = vld [vmem:[#allocation2 + $0xd8] sm:$0xff]
    %v157 = vld [vmem:[#allocation2 + $0xe0] sm:$0xff]
    %v158 = vld [vmem:[#allocation2 + $0xe8] sm:$0xff]
    %v159 = vld [vmem:[#allocation2 + $0xf0] sm:$0xff]
    %v160 = vld [vmem:[#allocation2 + $0xf8] sm:$0xff]
    %v161 = vld [vmem:[%s4] sm:$0x3]
    %v163 = vlaneseq
    %v164 = vshrl.u32 %v163, 7
    %v165 = vsub.s32 0, %v164
    %v166 = vrot.slane %v161, %v165
    %v167 = vlaneseq
    %v168 = vshrl.u32 %v167, 7
    %v169 = vsub.s32 1, %v168
    %v170 = vrot.slane %v161, %v169
    %v205 = vunpack.c.l.b16 %v129
    %v206 = vunpack.c.h.b16 %v129
    %v207 = vunpack.c.l.b16 %v130
    %v208 = vunpack.c.h.b16 %v130
    %v209 = vunpack.c.l.b16 %v131
    %v210 = vunpack.c.h.b16 %v131
    %v211 = vunpack.c.l.b16 %v132
    %v212 = vunpack.c.h.b16 %v132
    %v213 = vunpack.c.l.b16 %v133
    %v214 = vunpack.c.h.b16 %v133
    %v215 = vunpack.c.l.b16 %v134
    %v216 = vunpack.c.h.b16 %v134
    %v217 = vunpack.c.l.b16 %v135
    %v218 = vunpack.c.h.b16 %v135
    %v219 = vunpack.c.l.b16 %v136
    %v220 = vunpack.c.h.b16 %v136
    %v221 = vunpack.c.l.b16 %v137
    %v222 = vunpack.c.h.b16 %v137
    %v223 = vunpack.c.l.b16 %v138
    %v224 = vunpack.c.h.b16 %v138
    %v225 = vunpack.c.l.b16 %v139
    %v226 = vunpack.c.h.b16 %v139
    %v227 = vunpack.c.l.b16 %v140
    %v228 = vunpack.c.h.b16 %v140
    %v229 = vunpack.c.l.b16 %v141
    %v230 = vunpack.c.h.b16 %v141
    %v231 = vunpack.c.l.b16 %v142
    %v232 = vunpack.c.h.b16 %v142
    %v233 = vunpack.c.l.b16 %v143
    %v234 = vunpack.c.h.b16 %v143
    %v235 = vunpack.c.l.b16 %v144
    %v236 = vunpack.c.h.b16 %v144
    %v237 = vunpack.c.l.b16 %v145
    %v238 = vunpack.c.h.b16 %v145
    %v239 = vunpack.c.l.b16 %v146
    %v240 = vunpack.c.h.b16 %v146
    %v241 = vunpack.c.l.b16 %v147
    %v242 = vunpack.c.h.b16 %v147
    %v243 = vunpack.c.l.b16 %v148
    %v244 = vunpack.c.h.b16 %v148
    %v245 = vunpack.c.l.b16 %v149
    %v246 = vunpack.c.h.b16 %v149
    %v247 = vunpack.c.l.b16 %v150
    %v248 = vunpack.c.h.b16 %v150
    %v249 = vunpack.c.l.b16 %v151
    %v250 = vunpack.c.h.b16 %v151
    %v251 = vunpack.c.l.b16 %v152
    %v252 = vunpack.c.h.b16 %v152
    %v253 = vunpack.c.l.b16 %v153
    %v254 = vunpack.c.h.b16 %v153
    %v255 = vunpack.c.l.b16 %v154
    %v256 = vunpack.c.h.b16 %v154
    %v257 = vunpack.c.l.b16 %v155
    %v258 = vunpack.c.h.b16 %v155
    %v259 = vunpack.c.l.b16 %v156
    %v260 = vunpack.c.h.b16 %v156
    %v261 = vunpack.c.l.b16 %v157
    %v262 = vunpack.c.h.b16 %v157
    %v263 = vunpack.c.l.b16 %v158
    %v264 = vunpack.c.h.b16 %v158
    %v265 = vunpack.c.l.b16 %v159
    %v266 = vunpack.c.h.b16 %v159
    %v267 = vunpack.c.l.b16 %v160
    %v268 = vunpack.c.h.b16 %v160
    %v269 = vpack.c.b16 %v207, %v205
    %v270 = vpack.c.b16 %v208, %v206
    %v271 = vpack.c.b16 %v211, %v209
    %v272 = vpack.c.b16 %v212, %v210
    %v273 = vpack.c.b16 %v215, %v213
    %v274 = vpack.c.b16 %v216, %v214
    %v275 = vpack.c.b16 %v219, %v217
    %v276 = vpack.c.b16 %v220, %v218
    %v277 = vpack.c.b16 %v223, %v221
    %v278 = vpack.c.b16 %v224, %v222
    %v279 = vpack.c.b16 %v227, %v225
    %v280 = vpack.c.b16 %v228, %v226
    %v281 = vpack.c.b16 %v231, %v229
    %v282 = vpack.c.b16 %v232, %v230
    %v283 = vpack.c.b16 %v235, %v233
    %v284 = vpack.c.b16 %v236, %v234
    %v285 = vpack.c.b16 %v239, %v237
    %v286 = vpack.c.b16 %v240, %v238
    %v287 = vpack.c.b16 %v243, %v241
    %v288 = vpack.c.b16 %v244, %v242
    %v289 = vpack.c.b16 %v247, %v245
    %v290 = vpack.c.b16 %v248, %v246
    %v291 = vpack.c.b16 %v251, %v249
    %v292 = vpack.c.b16 %v252, %v250
    %v293 = vpack.c.b16 %v255, %v253
    %v294 = vpack.c.b16 %v256, %v254
    %v295 = vpack.c.b16 %v259, %v257
    %v296 = vpack.c.b16 %v260, %v258
    %v297 = vpack.c.b16 %v263, %v261
    %v298 = vpack.c.b16 %v264, %v262
    %v299 = vpack.c.b16 %v267, %v265
    %v300 = vpack.c.b16 %v268, %v266
    %333 = vmatprep.subr.bf16.mxu0 %v270
    %334 = vmatpush1.bf16.msra.mxu0 %v269
    %335 = vmatprep.subr.bf16.mxu0 %v272
    %336 = vmatpush1.bf16.msra.mxu0 %v271
    %337 = vmatprep.subr.bf16.mxu0 %v274
    %338 = vmatpush1.bf16.msra.mxu0 %v273
    %339 = vmatprep.subr.bf16.mxu0 %v276
    %340 = vmatpush1.bf16.msra.mxu0 %v275
    %341 = vmatprep.subr.bf16.mxu0 %v278
    %342 = vmatpush1.bf16.msra.mxu0 %v277
    %343 = vmatprep.subr.bf16.mxu0 %v280
    %344 = vmatpush1.bf16.msra.mxu0 %v279
    %345 = vmatprep.subr.bf16.mxu0 %v282
    %346 = vmatpush1.bf16.msra.mxu0 %v281
    %347 = vmatprep.subr.bf16.mxu0 %v284
    %348 = vmatpush1.bf16.msra.mxu0 %v283
    %349 = vmatprep.subr.bf16.mxu0 %v286
    %350 = vmatpush1.bf16.msra.mxu0 %v285
    %351 = vmatprep.subr.bf16.mxu0 %v288
    %352 = vmatpush1.bf16.msra.mxu0 %v287
    %353 = vmatprep.subr.bf16.mxu0 %v290
    %354 = vmatpush1.bf16.msra.mxu0 %v289
    %355 = vmatprep.subr.bf16.mxu0 %v292
    %356 = vmatpush1.bf16.msra.mxu0 %v291
    %357 = vmatprep.subr.bf16.mxu0 %v294
    %358 = vmatpush1.bf16.msra.mxu0 %v293
    %359 = vmatprep.subr.bf16.mxu0 %v296
    %360 = vmatpush1.bf16.msra.mxu0 %v295
    %361 = vmatprep.subr.bf16.mxu0 %v298
    %362 = vmatpush1.bf16.msra.mxu0 %v297
    %363 = vmatprep.subr.bf16.mxu0 %v300
    %364 = vmatpush1.bf16.msra.mxu0 %v299
    %365 = vmatprep.mubr.bf16.mxu0 %v128
    %366 = vmatmul.mubr.bf16.gmra.mrb[0].mxu0 %v127
    %v367 = vpop.f32.mrb[0].mxu0
    %v368 = vadd.f32 %v166, %v367
    %v369 = vpop.f32.mrb[0].mxu0
    %v370 = vadd.f32 %v170, %v369
    %v371 = vpop.f32.mrb[0].mxu0
    %v372 = vpop.f32.mrb[0].mxu0
    %373 = vdwg.mxu0
    %v374 = vmax.f32 %v368, 0.0
    %v375 = vmax.f32 %v370, 0.0
    %v376 = vpack.c.bf16 %v374, %v374
    %v377 = vpack.c.bf16 %v375, %v375
    %v378 = vld [vmem:[%s5] sm:$0xf]
    %v379 = vld [vmem:[%s5 + $0x4] sm:$0xf]
    %v380 = vld [vmem:[%s5 + $0x8] sm:$0xf]
    %v381 = vld [vmem:[%s5 + $0xc] sm:$0xf]
    %v382 = vld [vmem:[%s5 + $0x10] sm:$0xf]
    %v383 = vld [vmem:[%s5 + $0x14] sm:$0xf]
    %v384 = vld [vmem:[%s5 + $0x18] sm:$0xf]
    %v385 = vld [vmem:[%s5 + $0x1c] sm:$0xf]
    %v386 = vld [vmem:[%s5 + $0x20] sm:$0xf]
    %v387 = vld [vmem:[%s5 + $0x24] sm:$0xf]
    %v388 = vld [vmem:[%s5 + $0x28] sm:$0xf]
    %v389 = vld [vmem:[%s5 + $0x2c] sm:$0xf]
    %v390 = vld [vmem:[%s5 + $0x30] sm:$0xf]
    %v391 = vld [vmem:[%s5 + $0x34] sm:$0xf]
    %v392 = vld [vmem:[%s5 + $0x38] sm:$0xf]
    %v393 = vld [vmem:[%s5 + $0x3c] sm:$0xf]
    %v394 = vld [vmem:[%s5 + $0x40] sm:$0xf]
    %v395 = vld [vmem:[%s5 + $0x44] sm:$0xf]
    %v396 = vld [vmem:[%s5 + $0x48] sm:$0xf]
    %v397 = vld [vmem:[%s5 + $0x4c] sm:$0xf]
    %v398 = vld [vmem:[%s5 + $0x50] sm:$0xf]
    %v399 = vld [vmem:[%s5 + $0x54] sm:$0xf]
    %v400 = vld [vmem:[%s5 + $0x58] sm:$0xf]
    %v401 = vld [vmem:[%s5 + $0x5c] sm:$0xf]
    %v402 = vld [vmem:[%s5 + $0x60] sm:$0xf]
    %v403 = vld [vmem:[%s5 + $0x64] sm:$0xf]
    %v404 = vld [vmem:[%s5 + $0x68] sm:$0xf]
    %v405 = vld [vmem:[%s5 + $0x6c] sm:$0xf]
    %v406 = vld [vmem:[%s5 + $0x70] sm:$0xf]
    %v407 = vld [vmem:[%s5 + $0x74] sm:$0xf]
    %v408 = vld [vmem:[%s5 + $0x78] sm:$0xf]
    %v409 = vld [vmem:[%s5 + $0x7c] sm:$0xf]
    %v410 = vld [vmem:[%s6] sm:$0x1]
    %v411 = vlaneseq
    %v412 = vshrl.u32 %v411, 7
    %v413 = vsub.s32 0, %v412
    %v414 = vrot.slane %v410, %v413
    %v447 = vunpack.c.l.b16 %v378
    %v448 = vunpack.c.l.b16 %v379
    %v449 = vunpack.c.l.b16 %v380
    %v450 = vunpack.c.l.b16 %v381
    %v451 = vunpack.c.l.b16 %v382
    %v452 = vunpack.c.l.b16 %v383
    %v453 = vunpack.c.l.b16 %v384
    %v454 = vunpack.c.l.b16 %v385
    %v455 = vunpack.c.l.b16 %v386
    %v456 = vunpack.c.l.b16 %v387
    %v457 = vunpack.c.l.b16 %v388
    %v458 = vunpack.c.l.b16 %v389
    %v459 = vunpack.c.l.b16 %v390
    %v460 = vunpack.c.l.b16 %v391
    %v461 = vunpack.c.l.b16 %v392
    %v462 = vunpack.c.l.b16 %v393
    %v463 = vunpack.c.l.b16 %v394
    %v464 = vunpack.c.l.b16 %v395
    %v465 = vunpack.c.l.b16 %v396
    %v466 = vunpack.c.l.b16 %v397
    %v467 = vunpack.c.l.b16 %v398
    %v468 = vunpack.c.l.b16 %v399
    %v469 = vunpack.c.l.b16 %v400
    %v470 = vunpack.c.l.b16 %v401
    %v471 = vunpack.c.l.b16 %v402
    %v472 = vunpack.c.l.b16 %v403
    %v473 = vunpack.c.l.b16 %v404
    %v474 = vunpack.c.l.b16 %v405
    %v475 = vunpack.c.l.b16 %v406
    %v476 = vunpack.c.l.b16 %v407
    %v477 = vunpack.c.l.b16 %v408
    %v478 = vunpack.c.l.b16 %v409
    %v479 = vpack.c.b16 %v448, %v447
    %v480 = vpack.c.b16 %v450, %v449
    %v481 = vpack.c.b16 %v452, %v451
    %v482 = vpack.c.b16 %v454, %v453
    %v483 = vpack.c.b16 %v456, %v455
    %v484 = vpack.c.b16 %v458, %v457
    %v485 = vpack.c.b16 %v460, %v459
    %v486 = vpack.c.b16 %v462, %v461
    %v487 = vpack.c.b16 %v464, %v463
    %v488 = vpack.c.b16 %v466, %v465
    %v489 = vpack.c.b16 %v468, %v467
    %v490 = vpack.c.b16 %v470, %v469
    %v491 = vpack.c.b16 %v472, %v471
    %v492 = vpack.c.b16 %v474, %v473
    %v493 = vpack.c.b16 %v476, %v475
    %v494 = vpack.c.b16 %v478, %v477
    %511 = vmatprep.subr.bf16.mxu0 0
    %512 = vmatpush1.bf16.msra.mxu0 %v479
    %513 = vmatprep.subr.bf16.mxu0 0
    %514 = vmatpush1.bf16.msra.mxu0 %v480
    %515 = vmatprep.subr.bf16.mxu0 0
    %516 = vmatpush1.bf16.msra.mxu0 %v481
    %517 = vmatprep.subr.bf16.mxu0 0
    %518 = vmatpush1.bf16.msra.mxu0 %v482
    %519 = vmatprep.subr.bf16.mxu0 0
    %520 = vmatpush1.bf16.msra.mxu0 %v483
    %521 = vmatprep.subr.bf16.mxu0 0
    %522 = vmatpush1.bf16.msra.mxu0 %v484
    %523 = vmatprep.subr.bf16.mxu0 0
    %524 = vmatpush1.bf16.msra.mxu0 %v485
    %525 = vmatprep.subr.bf16.mxu0 0
    %526 = vmatpush1.bf16.msra.mxu0 %v486
    %527 = vmatprep.subr.bf16.mxu0 0
    %528 = vmatpush1.bf16.msra.mxu0 %v487
    %529 = vmatprep.subr.bf16.mxu0 0
    %530 = vmatpush1.bf16.msra.mxu0 %v488
    %531 = vmatprep.subr.bf16.mxu0 0
    %532 = vmatpush1.bf16.msra.mxu0 %v489
    %533 = vmatprep.subr.bf16.mxu0 0
    %534 = vmatpush1.bf16.msra.mxu0 %v490
    %535 = vmatprep.subr.bf16.mxu0 0
    %536 = vmatpush1.bf16.msra.mxu0 %v491
    %537 = vmatprep.subr.bf16.mxu0 0
    %538 = vmatpush1.bf16.msra.mxu0 %v492
    %539 = vmatprep.subr.bf16.mxu0 0
    %540 = vmatpush1.bf16.msra.mxu0 %v493
    %541 = vmatprep.subr.bf16.mxu0 0
    %542 = vmatpush1.bf16.msra.mxu0 %v494
    %543 = vmatprep.mubr.bf16.mxu0 %v377
    %544 = vmatmul.mubr.bf16.gmra.mrb[0].mxu0 %v376
    %v545 = vpop.f32.mrb[0].mxu0
    %v546 = vadd.f32 %v414, %v545
    %v547 = vpop.f32.mrb[0].mxu0
    %v548 = vpop.f32.mrb[0].mxu0
    %v549 = vpop.f32.mrb[0].mxu0
    %550 = vdwg.mxu0
    %v551 = vtanh.pop %v546
    %v552 = vld [vmem:[%s6 + $0x1] sm:$0x1]
    %v553 = vlaneseq
    %v554 = vshrl.u32 %v553, 7
    %v555 = vsub.s32 0, %v554
    %v556 = vrot.slane %v552, %v555
    %v557 = vmul.f32 %v551, %v556
    %v558 = vld [vmem:[%s6 + $0x2] sm:$0x1]
    %v559 = vlaneseq
    %v560 = vshrl.u32 %v559, 7
    %v561 = vsub.s32 0, %v560
    %v562 = vrot.slane %v558, %v561
    %v563 = vadd.f32 %v557, %v562
    %vm564 = vcmask 64512
    %565 = vst.msk [vmem:[#allocation5] sm:$0xff] %vm564, %v563
    // Predicated region
    $region34: #{tpu_custom_call.1} parent=1 // pred_check
      _
    $region35: #{tpu_custom_call.1} parent=1 // pred_check_branch
      %567 = sbr.rel (0) target = $region37
    $region36: #{tpu_custom_call.1} parent=1 // pred_region
      %s569 = ssub.s32 128, 128
      %570 = vsyncadd [#allocation4], %s569
      %s572 = sshll.u32 [#allocation5], 4
      %s573 = int_to_ptr.vmem [resolvable:$true] %s572
      %575 = dma.vmem_to_hbm [thread:$0]  %s573, 128, %s7, [#allocation4]
    $region37: #{tpu_custom_call.1} parent=1 // pred_fallthru
      _
    // Predicated region
    $region38: #{tpu_custom_call.1} parent=1 // pred_check
      _
    $region39: #{tpu_custom_call.1} parent=1 // pred_check_branch
      %577 = sbr.rel (0) target = $region41
    $region40: #{tpu_custom_call.1} parent=1 // pred_region
      %578 = dma.done [#allocation4], 128
    $region41: #{tpu_custom_call.1} parent=1 // pred_fallthru
      _
    %579 = vsyncpa [#allocation3], 1
    %580 = vsyncpa [#allocation4], 1

</llo_original>
